<compile_context>
chip_gen: v7x
topology: tpu7x:2x2x1
jax: 0.10.0
libtpu: 0.0.40
codegen_flags: <defaults>
</compile_context>

<pallas_src>
import jax
import jax.numpy as jnp
from jax.experimental import pallas as pl
from jax.experimental.pallas import tpu as pltpu


def _round_up(a, b):
    return ((a + b - 1) // b) * b


def _normed_linear_kernel(x_ref, w_ref, o_ref):
    # x_ref: (TM, Kp) bf16 input rows (K zero-padded).
    # w_ref: (Kp, Np) bf16 column-normalized weight (K/N zero-padded).
    # o_ref: (TM, Np) f32 output tile.
    x = x_ref[...].astype(jnp.float32)
    sq = jnp.sum(x * x, axis=-1, keepdims=True)              # (TM, 1), f32
    inv = jax.lax.rsqrt(jnp.maximum(sq, 1e-24))               # 1 / max(||x||, 1e-12)
    xn = (x * inv).astype(jnp.bfloat16)                       # normalized rows, bf16 for MXU
    acc = jnp.dot(xn, w_ref[...], preferred_element_type=jnp.float32)
    o_ref[...] = acc.astype(o_ref.dtype)


def normed_linear_forward(x, weight, *, tile_m=256, eps=1e-12):
    """x: (M, K) float. weight: (K, N) float. Returns (M, N) f32."""
    M, K = x.shape
    Kw, N = weight.shape
    assert K == Kw

    # --- one-time weight transform: L2-normalize columns (dim=0) in f32 ---
    w32 = weight.astype(jnp.float32)
    col_norm = jnp.sqrt(jnp.sum(w32 * w32, axis=0, keepdims=True))
    wn = w32 / jnp.maximum(col_norm, eps)

    # --- pad to TPU-friendly shapes: lane-dense N, aligned K, tiled M ---
    Kp = _round_up(K, 128)
    Np = _round_up(N, 128)
    if M < tile_m:
        tile_m = _round_up(M, 16)          # bf16 sublane packing; >= (8,*) tile rule
    Mp = _round_up(M, tile_m)
    grid_m = Mp // tile_m

    xp = jnp.zeros((Mp, Kp), jnp.bfloat16).at[:M, :K].set(x.astype(jnp.bfloat16))
    wp = jnp.zeros((Kp, Np), jnp.bfloat16).at[:K, :N].set(wn.astype(jnp.bfloat16))

    out = pl.pallas_call(
        _normed_linear_kernel,
        out_shape=jax.ShapeDtypeStruct((Mp, Np), jnp.float32),
        grid_spec=pltpu.PrefetchScalarGridSpec(
            num_scalar_prefetch=0,
            grid=(grid_m,),
            in_specs=[
                pl.BlockSpec((tile_m, Kp), lambda i: (i, 0)),
                pl.BlockSpec((Kp, Np), lambda i: (0, 0)),
            ],
            out_specs=pl.BlockSpec((tile_m, Np), lambda i: (i, 0)),
        ),
        compiler_params=pltpu.CompilerParams(
            dimension_semantics=("parallel",)),
    )(xp, wp)

    return out[:M, :N]


def _reference(x, weight, eps=1e-12):
    xn = x / jnp.maximum(jnp.linalg.norm(x, axis=1, keepdims=True), eps)
    wn = weight / jnp.maximum(jnp.linalg.norm(weight, axis=0, keepdims=True), eps)
    return xn @ wn


if __name__ == "__main__":
    key = jax.random.PRNGKey(0)
    k1, k2 = jax.random.split(key)

    B, in_features, out_features = 8, 32, 16
    x = jax.random.normal(k1, (B, in_features), dtype=jnp.float32)

    # Mimic the PyTorch init: uniform(-1, 1), columns renormed to 1e-5 then *1e5
    # (exact init is irrelevant to the forward since the weight is re-normalized).
    weight = jax.random.uniform(k2, (in_features, out_features),
                                dtype=jnp.float32, minval=-1.0, maxval=1.0)
    wcol = jnp.linalg.norm(weight, axis=0, keepdims=True)
    weight = weight / jnp.maximum(wcol, 1e-12)

    out = normed_linear_forward(x, weight)
    out = jax.block_until_ready(out)

    ref = _reference(x, weight)
    assert out.shape == (B, out_features)
    # bf16 MXU operands with f32 accumulation -> ~1e-2 tolerance vs f32 reference.
    assert jnp.allclose(out, ref, atol=2e-2, rtol=2e-2), float(
        jnp.max(jnp.abs(out - ref)))

    print("KERNEL_OK")
</pallas_src>

<mosaic_0001>
module attributes {stable_mosaic.version = 11 : i64} {
  func.func @_normed_linear_kernel(%arg0: i32, %arg1: memref<16x128xbf16, #tpu.memory_space<vmem>>, %arg2: memref<128x128xbf16, #tpu.memory_space<vmem>>, %arg3: memref<16x128xf32, #tpu.memory_space<vmem>>) attributes {dimension_semantics = [#tpu.dimension_semantics<parallel>], iteration_bounds = array<i64: 1>, scalar_prefetch = 0 : i64, scratch_operands = 0 : i64, tpu.core_type = #tpu.core_type<tc>, window_params = [{transform_indices = @transform_0, window_bounds = array<i64: 16, 128>}, {pipeline_mode = #tpu.pipeline_mode<synchronous>, transform_indices = @transform_1, window_bounds = array<i64: 128, 128>}, {transform_indices = @transform_2, window_bounds = array<i64: 16, 128>}]} {
    %c0 = arith.constant 0 : index
    %c0_0 = arith.constant 0 : index
    %0 = vector.load %arg1[%c0, %c0_0] : memref<16x128xbf16, #tpu.memory_space<vmem>>, vector<16x128xbf16>
    %1 = arith.extf %0 : vector<16x128xbf16> to vector<16x128xf32>
    %2 = arith.mulf %1, %1 : vector<16x128xf32>
    %cst = arith.constant dense<0.000000e+00> : vector<16xf32>
    %3 = vector.multi_reduction <add>, %2, %cst [1] : vector<16x128xf32> to vector<16xf32>
    %4 = vector.shape_cast %3 : vector<16xf32> to vector<16x1xf32>
    %cst_1 = arith.constant 1.000000e-24 : f32
    %5 = vector.broadcast %cst_1 : f32 to vector<16x1xf32>
    %6 = arith.maximumf %4, %5 : vector<16x1xf32>
    %7 = math.rsqrt %6 : vector<16x1xf32>
    %8 = vector.broadcast %7 : vector<16x1xf32> to vector<16x128xf32>
    %9 = arith.mulf %1, %8 : vector<16x128xf32>
    %10 = arith.truncf %9 : vector<16x128xf32> to vector<16x128xbf16>
    %c0_2 = arith.constant 0 : index
    %c0_3 = arith.constant 0 : index
    %11 = vector.load %arg2[%c0_2, %c0_3] : memref<128x128xbf16, #tpu.memory_space<vmem>>, vector<128x128xbf16>
    %cst_4 = arith.constant dense<0.000000e+00> : vector<16x128xf32>
    %12 = tpu.matmul %10, %11, %cst_4 {dimension_numbers = #tpu.dot_dimension_numbers<[1], [0], [0], [1], [0, 0, 1, 1], [], []>} : vector<16x128xbf16>, vector<128x128xbf16>, vector<16x128xf32> -> vector<16x128xf32>
    %c0_5 = arith.constant 0 : index
    %c0_6 = arith.constant 0 : index
    %13 = vector.load %arg3[%c0_5, %c0_6] : memref<16x128xf32, #tpu.memory_space<vmem>>, vector<16x128xf32>
    tpu.vector_store %arg3[%c0_5, %c0_6], %12 {strides = array<i32>} : memref<16x128xf32, #tpu.memory_space<vmem>>, vector<16x128xf32>,
    return
  }
  func.func @transform_0(%arg0: i32) -> (i32, i32) {
    %c0_i32 = arith.constant 0 : i32
    %c0_i32_0 = arith.constant 0 : i32
    return %arg0, %c0_i32 : i32, i32
  }
  func.func @transform_1(%arg0: i32) -> (i32, i32) {
    %c0_i32 = arith.constant 0 : i32
    %c0_i32_0 = arith.constant 0 : i32
    %c0_i32_1 = arith.constant 0 : i32
    return %c0_i32, %c0_i32_0 : i32, i32
  }
  func.func @transform_2(%arg0: i32) -> (i32, i32) {
    %c0_i32 = arith.constant 0 : i32
    %c0_i32_0 = arith.constant 0 : i32
    return %arg0, %c0_i32 : i32, i32
  }
}

</mosaic_0001>

<llo_original>
// kernel: tpu_custom_call.1
$region0: #{tpu_custom_call.1}
  #allocation0 [shape = 'u32[]', space=smem, size = 0x4, offset = 0x4, fixed_abs, tag = 'smem constant byte address 0x4 - core index']
  #allocation1 [shape = 'u32[144,128]{1,0:T(1,128)}', space=vmem, size = 0x12000, scoped, tag = 'internal scratch']
  %s0 = inlined_call_operand.hbm [shape: bf16[16,128], index: 0, kind: input, shape index: {}]
  %s1 = inlined_call_operand.hbm [shape: bf16[128,128], index: 1, kind: input, shape index: {}]
  %s2 = inlined_call_operand.hbm [shape: f32[16,128], index: 2, kind: output, shape index: {}]
  %s3 = sld [smem:[#allocation0]]
  $region26: #{tpu_custom_call.1} parent=0
    _
  %s5 = ssub.s32 1, %s3
  %s6 = scalar_select 0, %s5, %s3
  $region1: #{tpu_custom_call.1} parent=0
    #allocation2 [shape = 'u8[4096]{0}', space=vmem, size = 0x1000, scoped, tag = 'input window, operand 0, single buffered']
    #allocation3 [shape = 's32[1]{0}', space=sflag, size = 0x4, scoped, tag = 'scoped memory for tpu_custom_call.1']
    #allocation4 [shape = 's32[1]{0}', space=sflag, size = 0x4, scoped, tag = 'scoped memory for tpu_custom_call.1']
    #allocation5 [shape = 'u8[32768]{0}', space=vmem, size = 0x8000, scoped, tag = 'input window, operand 1, single buffered']
    #allocation6 [shape = 's32[1]{0}', space=sflag, size = 0x4, scoped, tag = 'scoped memory for tpu_custom_call.1']
    #allocation7 [shape = 'u8[8192]{0}', space=vmem, size = 0x2000, scoped, tag = 'output window, operand 0, single buffered']
    %7 = vsyncpa [#allocation3], 0
    %8 = vsyncpa [#allocation6], 0
    %9 = vsyncpa [#allocation4], 0
    // Predicated region
    $region2: #{tpu_custom_call.1} parent=1 // pred_check
      _
    $region3: #{tpu_custom_call.1} parent=1 // pred_check_branch
      %11 = sbr.rel (0) target = $region5
    $region4: #{tpu_custom_call.1} parent=1 // pred_region
      %s13 = ssub.s32 128, 128
      %14 = vsyncadd [#allocation3], %s13
      %s15 = sshll.u32 [#allocation2], 4
      %s16 = int_to_ptr.vmem [resolvable:$true] %s15
      %21 = dma.hbm_to_vmem [thread:$0]  %s0, 128, %s16, [#allocation3], 64, 64, 4
    $region5: #{tpu_custom_call.1} parent=1 // pred_fallthru
      _
    // Predicated region
    $region6: #{tpu_custom_call.1} parent=1 // pred_check
      _
    $region7: #{tpu_custom_call.1} parent=1 // pred_check_branch
      %23 = sbr.rel (0) target = $region9
    $region8: #{tpu_custom_call.1} parent=1 // pred_region
      %s25 = ssub.s32 1024, 1024
      %26 = vsyncadd [#allocation6], %s25
      %s27 = sshll.u32 [#allocation5], 4
      %s28 = int_to_ptr.vmem [resolvable:$true] %s27
      %33 = dma.hbm_to_vmem [thread:$0]  %s1, 1024, %s28, [#allocation6], 64, 64, 4
    $region9: #{tpu_custom_call.1} parent=1 // pred_fallthru
      _
    // Predicated region
    $region10: #{tpu_custom_call.1} parent=1 // pred_check
      _
    $region11: #{tpu_custom_call.1} parent=1 // pred_check_branch
      %35 = sbr.rel (0) target = $region13
    $region12: #{tpu_custom_call.1} parent=1 // pred_region
      %36 = dma.done [#allocation3], 128
    $region13: #{tpu_custom_call.1} parent=1 // pred_fallthru
      _
    // Predicated region
    $region14: #{tpu_custom_call.1} parent=1 // pred_check
      _
    $region15: #{tpu_custom_call.1} parent=1 // pred_check_branch
      %38 = sbr.rel (0) target = $region17
    $region16: #{tpu_custom_call.1} parent=1 // pred_region
      %39 = dma.done [#allocation6], 1024
    $region17: #{tpu_custom_call.1} parent=1 // pred_fallthru
      _
    %v41 = vld [vmem:[#allocation2] sm:$0xf]
    %v42 = vld [vmem:[#allocation2 + $0x4] sm:$0xf]
    %v43 = vunpack.c.l.bf16 %v41
    %v44 = vunpack.c.l.bf16 %v42
    %v45 = vmul.f32 %v43, %v43
    %v46 = vmul.f32 %v44, %v44
    %47 = vadd.xlane.f32.xlu0 %v45
    %v48 = vpop.xlane.xlu0 %47
    %49 = vadd.xlane.f32.xlu0 %v46
    %v50 = vpop.xlane.xlu0 %49
    %v51 = vmax.f32 %v48, 1e-24
    %v52 = vmax.f32 %v50, 1e-24
    %v53 = vrsqrt.pop %v51
    %v54 = vrsqrt.pop %v52
    %v55 = vmul.f32 %v43, %v53
    %v56 = vmul.f32 %v44, %v54
    %v57 = vpack.c.bf16 %v56, %v55
    %v58 = vld [vmem:[#allocation5] sm:$0xf]
    %v59 = vld [vmem:[#allocation5 + $0x4] sm:$0xf]
    %v60 = vld [vmem:[#allocation5 + $0x8] sm:$0xf]
    %v61 = vld [vmem:[#allocation5 + $0xc] sm:$0xf]
    %v62 = vld [vmem:[#allocation5 + $0x10] sm:$0xf]
    %v63 = vld [vmem:[#allocation5 + $0x14] sm:$0xf]
    %v64 = vld [vmem:[#allocation5 + $0x18] sm:$0xf]
    %v65 = vld [vmem:[#allocation5 + $0x1c] sm:$0xf]
    %v66 = vld [vmem:[#allocation5 + $0x20] sm:$0xf]
    %v67 = vld [vmem:[#allocation5 + $0x24] sm:$0xf]
    %v68 = vld [vmem:[#allocation5 + $0x28] sm:$0xf]
    %v69 = vld [vmem:[#allocation5 + $0x2c] sm:$0xf]
    %v70 = vld [vmem:[#allocation5 + $0x30] sm:$0xf]
    %v71 = vld [vmem:[#allocation5 + $0x34] sm:$0xf]
    %v72 = vld [vmem:[#allocation5 + $0x38] sm:$0xf]
    %v73 = vld [vmem:[#allocation5 + $0x3c] sm:$0xf]
    %v90 = vunpack.c.l.b16 %v58
    %v91 = vunpack.c.l.b16 %v59
    %v92 = vunpack.c.l.b16 %v60
    %v93 = vunpack.c.l.b16 %v61
    %v94 = vunpack.c.l.b16 %v62
    %v95 = vunpack.c.l.b16 %v63
    %v96 = vunpack.c.l.b16 %v64
    %v97 = vunpack.c.l.b16 %v65
    %v98 = vunpack.c.l.b16 %v66
    %v99 = vunpack.c.l.b16 %v67
    %v100 = vunpack.c.l.b16 %v68
    %v101 = vunpack.c.l.b16 %v69
    %v102 = vunpack.c.l.b16 %v70
    %v103 = vunpack.c.l.b16 %v71
    %v104 = vunpack.c.l.b16 %v72
    %v105 = vunpack.c.l.b16 %v73
    %v106 = vpack.c.b16 %v91, %v90
    %v107 = vpack.c.b16 %v93, %v92
    %v108 = vpack.c.b16 %v95, %v94
    %v109 = vpack.c.b16 %v97, %v96
    %v110 = vpack.c.b16 %v99, %v98
    %v111 = vpack.c.b16 %v101, %v100
    %v112 = vpack.c.b16 %v103, %v102
    %v113 = vpack.c.b16 %v105, %v104
    %122 = vmatprep.subr.bf16.mxu0 0
    %123 = vmatpush1.bf16.msra.mxu0 %v106
    %124 = vmatprep.subr.bf16.mxu0 0
    %125 = vmatpush1.bf16.msra.mxu0 %v107
    %126 = vmatprep.subr.bf16.mxu0 0
    %127 = vmatpush1.bf16.msra.mxu0 %v108
    %128 = vmatprep.subr.bf16.mxu0 0
    %129 = vmatpush1.bf16.msra.mxu0 %v109
    %130 = vmatprep.subr.bf16.mxu0 0
    %131 = vmatpush1.bf16.msra.mxu0 %v110
    %132 = vmatprep.subr.bf16.mxu0 0
    %133 = vmatpush1.bf16.msra.mxu0 %v111
    %134 = vmatprep.subr.bf16.mxu0 0
    %135 = vmatpush1.bf16.msra.mxu0 %v112
    %136 = vmatprep.subr.bf16.mxu0 0
    %137 = vmatpush1.bf16.msra.mxu0 %v113
    %138 = vmatprep.subr.bf16.mxu0 0
    %139 = vmatpush1.bf16.msra.mxu0 0
    %140 = vmatprep.subr.bf16.mxu0 0
    %141 = vmatpush1.bf16.msra.mxu0 0
    %142 = vmatprep.subr.bf16.mxu0 0
    %143 = vmatpush1.bf16.msra.mxu0 0
    %144 = vmatprep.subr.bf16.mxu0 0
    %145 = vmatpush1.bf16.msra.mxu0 0
    %146 = vmatprep.subr.bf16.mxu0 0
    %147 = vmatpush1.bf16.msra.mxu0 0
    %148 = vmatprep.subr.bf16.mxu0 0
    %149 = vmatpush1.bf16.msra.mxu0 0
    %150 = vmatprep.subr.bf16.mxu0 0
    %151 = vmatpush1.bf16.msra.mxu0 0
    %152 = vmatprep.subr.bf16.mxu0 0
    %153 = vmatpush1.bf16.msra.mxu0 0
    %154 = vmatprep.mubr.bf16.mxu0 0
    %155 = vmatmul.mubr.bf16.gmra.mrb[0].mxu0 %v57
    %v156 = vpop.f32.mrb[0].mxu0
    %v157 = vadd.f32 0.0, %v156
    %v158 = vpop.f32.mrb[0].mxu0
    %v159 = vpop.f32.mrb[0].mxu0
    %v160 = vadd.f32 0.0, %v159
    %v161 = vpop.f32.mrb[0].mxu0
    %162 = vdwg.mxu0
    %163 = vst [vmem:[#allocation7] sm:$0xff] %v157
    %164 = vst [vmem:[#allocation7 + $0x8] sm:$0xff] %v160
    // Predicated region
    $region18: #{tpu_custom_call.1} parent=1 // pred_check
      _
    $region19: #{tpu_custom_call.1} parent=1 // pred_check_branch
      %166 = sbr.rel (0) target = $region21
    $region20: #{tpu_custom_call.1} parent=1 // pred_region
      %s168 = ssub.s32 256, 256
      %169 = vsyncadd [#allocation4], %s168
      %s170 = sshll.u32 [#allocation7], 4
      %s171 = int_to_ptr.vmem [resolvable:$true] %s170
      %176 = dma.vmem_to_hbm [thread:$0]  %s171, 256, %s2, [#allocation4], 128, 128, 8
    $region21: #{tpu_custom_call.1} parent=1 // pred_fallthru
      _
    // Predicated region
    $region22: #{tpu_custom_call.1} parent=1 // pred_check
      _
    $region23: #{tpu_custom_call.1} parent=1 // pred_check_branch
      %178 = sbr.rel (0) target = $region25
    $region24: #{tpu_custom_call.1} parent=1 // pred_region
      %179 = dma.done [#allocation4], 256
    $region25: #{tpu_custom_call.1} parent=1 // pred_fallthru
      _
    %180 = vsyncpa [#allocation3], 1
    %181 = vsyncpa [#allocation6], 1
    %182 = vsyncpa [#allocation4], 1

</llo_original>
